<compile_context>
chip_gen: v7x
topology: tpu7x:2x2x1
jax: 0.10.0
libtpu: 0.0.40
codegen_flags: <defaults>
</compile_context>

<pallas_src>
import functools

import jax
import jax.numpy as jnp
from jax.experimental import pallas as pl
from jax.experimental.pallas import tpu as pltpu


def _round_up(x, m):
    return (x + m - 1) // m * m


def _fcn_kernel(x_ref, w_in_ref, b_in_ref, w_h_ref, b_h_ref,
                w_out_ref, b_out_ref, o_ref, *,
                n_hidden_layers, n_input, sub_tile, n_sub, matmul_dtype):
    """Whole MLP forward for one (features, batch_tile) tile.

    The tile is processed as `n_sub` lane-dense `sub_tile`-wide slices: the big
    BlockSpec tile amortizes per-grid-step overhead while each slice keeps the
    live activation small enough to stay in vregs.
    """
    # Hoist parameter loads out of the slice loop (loaded once per grid step).
    w_in = w_in_ref[...]                    # (H, n_in)   f32 (VPU layer)
    b_in = b_in_ref[...]                    # (H, 1)      f32
    w_out = w_out_ref[...]                  # (n_out, H)  matmul dtype
    b_out = b_out_ref[...]                  # (n_out, 1)  f32
    w_hs = [w_h_ref[l] for l in range(n_hidden_layers)]
    b_hs = [b_h_ref[l] for l in range(n_hidden_layers)]

    for s in range(n_sub):                  # static, fully unrolled
        sl = slice(s * sub_tile, (s + 1) * sub_tile)
        x = x_ref[:, sl]                    # (n_in, sub)

        # --- Input layer: Linear + Tanh ---------------------------------
        # K = n_input is tiny (coordinate inputs): VPU broadcast FMAs,
        # z[h, b] = sum_k W_in[h, k] * x[k, b].
        z = w_in[:, 0:1] * x[0:1, :]
        for k in range(1, n_input):
            z = z + w_in[:, k:k + 1] * x[k:k + 1, :]
        h = jnp.tanh(z + b_in)              # (H, sub) f32, bias broadcasts on lanes

        # --- Hidden layers: (N_LAYERS - 1) x (Linear + Tanh) -------------
        # bf16 MXU matmuls with f32 accumulation; tanh in f32 (EUP).
        for l in range(n_hidden_layers):
            z = jnp.dot(w_hs[l], h.astype(matmul_dtype),
                        preferred_element_type=jnp.float32) + b_hs[l]
            h = jnp.tanh(z)

        # --- Output layer: Linear, lane-dense unmasked store -------------
        o_ref[:, sl] = (
            jnp.dot(w_out, h.astype(matmul_dtype),
                    preferred_element_type=jnp.float32) + b_out
        ).astype(o_ref.dtype)


@functools.partial(jax.jit, static_argnames=("batch_tile", "use_bf16"))
def fcn_forward(x, params, *, batch_tile=2048, use_bf16=True):
    """FCN forward with a Pallas kernel. x: (B, n_in) -> (B, n_out)."""
    w_in, b_in, w_h, b_h, w_out, b_out = params
    B, n_in = x.shape
    n_hidden = w_in.shape[0]
    n_out = w_out.shape[0]
    n_hidden_layers = w_h.shape[0]

    matmul_dtype = jnp.bfloat16 if use_bf16 else jnp.float32
    w_h_k = w_h.astype(matmul_dtype)
    w_out_k = w_out.astype(matmul_dtype)

    # Guard N_LAYERS == 1: a zero-extent BlockSpec won't lower, so feed a
    # dummy (1, H, H) block and simply skip the hidden loop in the kernel.
    if n_hidden_layers == 0:
        w_h_k = jnp.zeros((1, n_hidden, n_hidden), matmul_dtype)
        b_h = jnp.zeros((1, n_hidden, 1), jnp.float32)
    n_h_blocks = max(n_hidden_layers, 1)

    # ---- Batch tiling ------------------------------------------------------
    lanes = _round_up(B, 128)                       # 128-lane columns needed
    bt = min(_round_up(batch_tile, 128), lanes)
    # Guarantee >=2 grid steps whenever there are >=2 lane-tiles, so the
    # "parallel" batch axis can shard across v7x's two TensorCores.
    if lanes >= 256:
        bt = min(bt, max(128, (lanes // 2 // 128) * 128))
    # In-kernel sub-tile: biggest of 512 / 256 / 128 that divides bt.
    if bt % 512 == 0:
        sub = 512
    elif bt % 256 == 0:
        sub = 256
    else:
        sub = 128
    n_sub = bt // sub
    b_pad = _round_up(B, bt)

    # Batch onto the lane (last) axis, zero-padded to a whole number of tiles.
    # (Padded lanes run tanh on zeros -> finite, and are sliced off below.)
    x_t = jnp.zeros((n_in, b_pad), x.dtype).at[:, :B].set(x.T)

    kernel = functools.partial(
        _fcn_kernel,
        n_hidden_layers=n_hidden_layers,
        n_input=n_in,
        sub_tile=sub,
        n_sub=n_sub,
        matmul_dtype=matmul_dtype,
    )

    grid = (b_pad // bt,)
    out_t = pl.pallas_call(
        kernel,
        out_shape=jax.ShapeDtypeStruct((n_out, b_pad), jnp.float32),
        grid_spec=pltpu.PrefetchScalarGridSpec(
            num_scalar_prefetch=0,
            grid=grid,
            in_specs=[
                # x^T: tiled over the batch (lane) axis
                pl.BlockSpec((n_in, bt), lambda i: (0, i)),
                # parameters: full blocks, same block index every grid step
                pl.BlockSpec((n_hidden, n_in), lambda i: (0, 0)),
                pl.BlockSpec((n_hidden, 1), lambda i: (0, 0)),
                pl.BlockSpec((n_h_blocks, n_hidden, n_hidden),
                             lambda i: (0, 0, 0)),
                pl.BlockSpec((n_h_blocks, n_hidden, 1),
                             lambda i: (0, 0, 0)),
                pl.BlockSpec((n_out, n_hidden), lambda i: (0, 0)),
                pl.BlockSpec((n_out, 1), lambda i: (0, 0)),
            ],
            out_specs=pl.BlockSpec((n_out, bt), lambda i: (0, i)),
        ),
        compiler_params=pltpu.CompilerParams(
            dimension_semantics=("parallel",),
        ),
    )(x_t, w_in, b_in, w_h_k, b_h, w_out_k, b_out)

    # Back to PyTorch's (batch, n_out) layout; drop batch padding.
    return out_t[:, :B].T


def init_fcn_params(key, n_input, n_output, n_hidden, n_layers):
    """nn.Linear-style U(-1/sqrt(fan_in), 1/sqrt(fan_in)) init.

    Weights use PyTorch's native (out_features, in_features) layout; biases
    are stored as (out_features, 1) columns so they broadcast along lanes.
    """
    keys = jax.random.split(key, 6)

    def uniform(k, shape, fan_in):
        bound = 1.0 / jnp.sqrt(fan_in)
        return jax.random.uniform(k, shape, jnp.float32, -bound, bound)

    w_in = uniform(keys[0], (n_hidden, n_input), n_input)
    b_in = uniform(keys[1], (n_hidden, 1), n_input)
    w_h = uniform(keys[2], (n_layers - 1, n_hidden, n_hidden), n_hidden)
    b_h = uniform(keys[3], (n_layers - 1, n_hidden, 1), n_hidden)
    w_out = uniform(keys[4], (n_output, n_hidden), n_hidden)
    b_out = uniform(keys[5], (n_output, 1), n_hidden)
    return (w_in, b_in, w_h, b_h, w_out, b_out)


def fcn_ref(x, params):
    """Plain-JAX reference (PyTorch math: x @ W.T + b) for correctness checks."""
    w_in, b_in, w_h, b_h, w_out, b_out = params
    h = jnp.tanh(x @ w_in.T + b_in[:, 0])
    for layer in range(w_h.shape[0]):
        h = jnp.tanh(h @ w_h[layer].T + b_h[layer, :, 0])
    return h @ w_out.T + b_out[:, 0]


if __name__ == "__main__":
    # PINN-typical shapes: 2 input coords (e.g. x, t), 1 output field.
    N_INPUT, N_OUTPUT, N_HIDDEN, N_LAYERS = 2, 1, 32, 3

    key = jax.random.PRNGKey(0)
    k_x1, k_x2, k_p = jax.random.split(key, 3)
    params = init_fcn_params(k_p, N_INPUT, N_OUTPUT, N_HIDDEN, N_LAYERS)

    # Small batch, deliberately NOT a multiple of 128 -> exercises padding and
    # the >=2-grid-step cap (grid = 3 steps of 128 lanes).
    x1 = jax.random.normal(k_x1, (300, N_INPUT), dtype=jnp.float32)
    ref1 = fcn_ref(x1, params)

    out_f32 = jax.block_until_ready(fcn_forward(x1, params, use_bf16=False))
    assert out_f32.shape == (300, N_OUTPUT)
    assert jnp.allclose(out_f32, ref1, atol=1e-5, rtol=1e-5), \
        "f32 path mismatch vs JAX reference"

    out_bf16 = jax.block_until_ready(fcn_forward(x1, params))
    assert jnp.allclose(out_bf16, ref1, atol=2e-2, rtol=2e-2), \
        "bf16 path mismatch vs JAX reference"

    # Larger batch -> exercises the default big tile, in-kernel 512-lane
    # sub-tiling (n_sub > 1), and a multi-step parallel grid.
    x2 = jax.random.normal(k_x2, (3000, N_INPUT), dtype=jnp.float32)
    ref2 = fcn_ref(x2, params)
    out2 = jax.block_until_ready(fcn_forward(x2, params))
    assert out2.shape == (3000, N_OUTPUT)
    assert jnp.allclose(out2, ref2, atol=2e-2, rtol=2e-2), \
        "bf16 sub-tiled path mismatch vs JAX reference"

    print("KERNEL_OK")
</pallas_src>

<mosaic_0001>
module attributes {stable_mosaic.version = 11 : i64} {
  func.func @_fcn_kernel(%arg0: i32, %arg1: memref<2x128xf32, #tpu.memory_space<vmem>>, %arg2: memref<32x2xf32, #tpu.memory_space<vmem>>, %arg3: memref<32x1xf32, #tpu.memory_space<vmem>>, %arg4: memref<2x32x32xf32, #tpu.memory_space<vmem>>, %arg5: memref<2x32x1xf32, #tpu.memory_space<vmem>>, %arg6: memref<1x32xf32, #tpu.memory_space<vmem>>, %arg7: memref<1x1xf32, #tpu.memory_space<vmem>>, %arg8: memref<1x128xf32, #tpu.memory_space<vmem>>) attributes {dimension_semantics = [#tpu.dimension_semantics<parallel>], iteration_bounds = array<i64: 3>, scalar_prefetch = 0 : i64, scratch_operands = 0 : i64, tpu.core_type = #tpu.core_type<tc>, window_params = [{transform_indices = @transform_0, window_bounds = array<i64: 2, 128>}, {pipeline_mode = #tpu.pipeline_mode<synchronous>, transform_indices = @transform_1, window_bounds = array<i64: 32, 2>}, {pipeline_mode = #tpu.pipeline_mode<synchronous>, transform_indices = @transform_2, window_bounds = array<i64: 32, 1>}, {pipeline_mode = #tpu.pipeline_mode<synchronous>, transform_indices = @transform_3, window_bounds = array<i64: 2, 32, 32>}, {pipeline_mode = #tpu.pipeline_mode<synchronous>, transform_indices = @transform_4, window_bounds = array<i64: 2, 32, 1>}, {pipeline_mode = #tpu.pipeline_mode<synchronous>, transform_indices = @transform_5, window_bounds = array<i64: 1, 32>}, {pipeline_mode = #tpu.pipeline_mode<synchronous>, transform_indices = @transform_6, window_bounds = array<i64: 1, 1>}, {transform_indices = @transform_7, window_bounds = array<i64: 1, 128>}]} {
    %c0 = arith.constant 0 : index
    %c0_0 = arith.constant 0 : index
    %0 = vector.load %arg2[%c0, %c0_0] : memref<32x2xf32, #tpu.memory_space<vmem>>, vector<32x2xf32>
    %c0_1 = arith.constant 0 : index
    %c0_2 = arith.constant 0 : index
    %1 = vector.load %arg3[%c0_1, %c0_2] : memref<32x1xf32, #tpu.memory_space<vmem>>, vector<32x1xf32>
    %c0_3 = arith.constant 0 : index
    %c0_4 = arith.constant 0 : index
    %2 = vector.load %arg6[%c0_3, %c0_4] : memref<1x32xf32, #tpu.memory_space<vmem>>, vector<1x32xf32>
    %c0_5 = arith.constant 0 : index
    %c0_6 = arith.constant 0 : index
    %3 = vector.load %arg7[%c0_5, %c0_6] : memref<1x1xf32, #tpu.memory_space<vmem>>, vector<1x1xf32>
    %c0_7 = arith.constant 0 : index
    %c0_8 = arith.constant 0 : index
    %c0_9 = arith.constant 0 : index
    %4 = vector.load %arg4[%c0_7, %c0_8, %c0_9] : memref<2x32x32xf32, #tpu.memory_space<vmem>>, vector<1x32x32xf32>
    %5 = vector.shape_cast %4 : vector<1x32x32xf32> to vector<32x32xf32>
    %c1 = arith.constant 1 : index
    %c0_10 = arith.constant 0 : index
    %c0_11 = arith.constant 0 : index
    %6 = vector.load %arg4[%c1, %c0_10, %c0_11] : memref<2x32x32xf32, #tpu.memory_space<vmem>>, vector<1x32x32xf32>
    %7 = vector.shape_cast %6 : vector<1x32x32xf32> to vector<32x32xf32>
    %c0_12 = arith.constant 0 : index
    %c0_13 = arith.constant 0 : index
    %c0_14 = arith.constant 0 : index
    %8 = vector.load %arg5[%c0_12, %c0_13, %c0_14] : memref<2x32x1xf32, #tpu.memory_space<vmem>>, vector<1x32x1xf32>
    %9 = vector.shape_cast %8 : vector<1x32x1xf32> to vector<32x1xf32>
    %c1_15 = arith.constant 1 : index
    %c0_16 = arith.constant 0 : index
    %c0_17 = arith.constant 0 : index
    %10 = vector.load %arg5[%c1_15, %c0_16, %c0_17] : memref<2x32x1xf32, #tpu.memory_space<vmem>>, vector<1x32x1xf32>
    %11 = vector.shape_cast %10 : vector<1x32x1xf32> to vector<32x1xf32>
    %c0_18 = arith.constant 0 : index
    %c0_19 = arith.constant 0 : index
    %12 = vector.load %arg1[%c0_18, %c0_19] : memref<2x128xf32, #tpu.memory_space<vmem>>, vector<2x128xf32>
    %13 = vector.extract_strided_slice %0 {offsets = [0, 0], sizes = [32, 1], strides = [1, 1]} : vector<32x2xf32> to vector<32x1xf32>
    %14 = vector.extract_strided_slice %12 {offsets = [0, 0], sizes = [1, 128], strides = [1, 1]} : vector<2x128xf32> to vector<1x128xf32>
    %15 = vector.broadcast %13 : vector<32x1xf32> to vector<32x128xf32>
    %16 = vector.broadcast %14 : vector<1x128xf32> to vector<32x128xf32>
    %17 = arith.mulf %15, %16 : vector<32x128xf32>
    %18 = vector.extract_strided_slice %0 {offsets = [0, 1], sizes = [32, 1], strides = [1, 1]} : vector<32x2xf32> to vector<32x1xf32>
    %19 = vector.extract_strided_slice %12 {offsets = [1, 0], sizes = [1, 128], strides = [1, 1]} : vector<2x128xf32> to vector<1x128xf32>
    %20 = vector.broadcast %18 : vector<32x1xf32> to vector<32x128xf32>
    %21 = vector.broadcast %19 : vector<1x128xf32> to vector<32x128xf32>
    %22 = arith.mulf %20, %21 : vector<32x128xf32>
    %23 = arith.addf %17, %22 : vector<32x128xf32>
    %24 = vector.broadcast %1 : vector<32x1xf32> to vector<32x128xf32>
    %25 = arith.addf %23, %24 : vector<32x128xf32>
    %26 = math.tanh %25 : vector<32x128xf32>
    %cst = arith.constant dense<0.000000e+00> : vector<32x128xf32>
    %27 = tpu.matmul %5, %26, %cst {dimension_numbers = #tpu.dot_dimension_numbers<[1], [0], [0], [1], [0, 0, 1, 1], [], []>} : vector<32x32xf32>, vector<32x128xf32>, vector<32x128xf32> -> vector<32x128xf32>
    %28 = vector.broadcast %9 : vector<32x1xf32> to vector<32x128xf32>
    %29 = arith.addf %27, %28 : vector<32x128xf32>
    %30 = math.tanh %29 : vector<32x128xf32>
    %cst_20 = arith.constant dense<0.000000e+00> : vector<32x128xf32>
    %31 = tpu.matmul %7, %30, %cst_20 {dimension_numbers = #tpu.dot_dimension_numbers<[1], [0], [0], [1], [0, 0, 1, 1], [], []>} : vector<32x32xf32>, vector<32x128xf32>, vector<32x128xf32> -> vector<32x128xf32>
    %32 = vector.broadcast %11 : vector<32x1xf32> to vector<32x128xf32>
    %33 = arith.addf %31, %32 : vector<32x128xf32>
    %34 = math.tanh %33 : vector<32x128xf32>
    %cst_21 = arith.constant dense<0.000000e+00> : vector<1x128xf32>
    %35 = tpu.matmul %2, %34, %cst_21 {dimension_numbers = #tpu.dot_dimension_numbers<[1], [0], [0], [1], [0, 0, 1, 1], [], []>} : vector<1x32xf32>, vector<32x128xf32>, vector<1x128xf32> -> vector<1x128xf32>
    %36 = vector.broadcast %3 : vector<1x1xf32> to vector<1x128xf32>
    %37 = arith.addf %35, %36 : vector<1x128xf32>
    %c0_22 = arith.constant 0 : index
    %c0_23 = arith.constant 0 : index
    %38 = vector.load %arg8[%c0_22, %c0_23] : memref<1x128xf32, #tpu.memory_space<vmem>>, vector<1x128xf32>
    tpu.vector_store %arg8[%c0_22, %c0_23], %37 {strides = array<i32>} : memref<1x128xf32, #tpu.memory_space<vmem>>, vector<1x128xf32>,
    return
  }
  func.func @transform_0(%arg0: i32) -> (i32, i32) {
    %c0_i32 = arith.constant 0 : i32
    %c0_i32_0 = arith.constant 0 : i32
    return %c0_i32, %arg0 : i32, i32
  }
  func.func @transform_1(%arg0: i32) -> (i32, i32) {
    %c0_i32 = arith.constant 0 : i32
    %c0_i32_0 = arith.constant 0 : i32
    %c0_i32_1 = arith.constant 0 : i32
    return %c0_i32, %c0_i32_0 : i32, i32
  }
  func.func @transform_2(%arg0: i32) -> (i32, i32) {
    %c0_i32 = arith.constant 0 : i32
    %c0_i32_0 = arith.constant 0 : i32
    %c0_i32_1 = arith.constant 0 : i32
    return %c0_i32, %c0_i32_0 : i32, i32
  }
  func.func @transform_3(%arg0: i32) -> (i32, i32, i32) {
    %c0_i32 = arith.constant 0 : i32
    %c0_i32_0 = arith.constant 0 : i32
    %c0_i32_1 = arith.constant 0 : i32
    %c0_i32_2 = arith.constant 0 : i32
    return %c0_i32, %c0_i32_0, %c0_i32_1 : i32, i32, i32
  }
  func.func @transform_4(%arg0: i32) -> (i32, i32, i32) {
    %c0_i32 = arith.constant 0 : i32
    %c0_i32_0 = arith.constant 0 : i32
    %c0_i32_1 = arith.constant 0 : i32
    %c0_i32_2 = arith.constant 0 : i32
    return %c0_i32, %c0_i32_0, %c0_i32_1 : i32, i32, i32
  }
  func.func @transform_5(%arg0: i32) -> (i32, i32) {
    %c0_i32 = arith.constant 0 : i32
    %c0_i32_0 = arith.constant 0 : i32
    %c0_i32_1 = arith.constant 0 : i32
    return %c0_i32, %c0_i32_0 : i32, i32
  }
  func.func @transform_6(%arg0: i32) -> (i32, i32) {
    %c0_i32 = arith.constant 0 : i32
    %c0_i32_0 = arith.constant 0 : i32
    %c0_i32_1 = arith.constant 0 : i32
    return %c0_i32, %c0_i32_0 : i32, i32
  }
  func.func @transform_7(%arg0: i32) -> (i32, i32) {
    %c0_i32 = arith.constant 0 : i32
    %c0_i32_0 = arith.constant 0 : i32
    return %c0_i32, %arg0 : i32, i32
  }
}

</mosaic_0001>

<llo_original>
// kernel: fcn_forward.1
$region0: #{fcn_forward.1}
  #allocation0 [shape = 'u32[]', space=smem, size = 0x4, offset = 0x4, fixed_abs, tag = 'smem constant byte address 0x4 - core index']
  #allocation1 [shape = 'u32[144,128]{1,0:T(1,128)}', space=vmem, size = 0x12000, scoped, tag = 'internal scratch']
  #allocation2 [shape = 'f32[1,1]{1,0:T(1,128)S(1)}', space=vmem, size = 0x200, scoped, tag = 'scoped memory for fcn_forward.1']
  %s0 = inlined_call_operand.vmem [shape: f32[2,384], index: 0, kind: input, shape index: {}]
  %s1 = inlined_call_operand.vmem [shape: f32[32,2], index: 1, kind: input, shape index: {}]
  %s2 = inlined_call_operand.vmem [shape: f32[32,1], index: 2, kind: input, shape index: {}]
  %s3 = inlined_call_operand.vmem [shape: f32[2,32,32], index: 3, kind: input, shape index: {}]
  %s4 = inlined_call_operand.vmem [shape: f32[2,32,1], index: 4, kind: input, shape index: {}]
  %s5 = inlined_call_operand.vmem [shape: f32[1,32], index: 5, kind: input, shape index: {}]
  %s6 = inlined_call_operand.<no memory space> [shape: f32[1,1], index: 6, kind: input, shape index: {}]
  %s7 = inlined_call_operand.vmem [shape: f32[1,384], index: 7, kind: output, shape index: {}]
  %s8 = sld [smem:[#allocation0]]
  $region61: #{fcn_forward.1} parent=0
    _
  %s10 = ssub.s32 1, %s8
  %s11 = scalar_select 0, %s10, %s8
  %v12 = vstv %s6
  %13 = vst [vmem:[#allocation2] sm:$0x1] %v12
  loop: start=0, step=1, limit=5
  $region2: #{fcn_forward.1} parent=0 // loop_pre_header
    _
  $region3: #{fcn_forward.1} parent=0 // loop_header
    %s15 = sphi 0, %s19
    %p16 = scmp.ge.s32.totalorder %s15, 5
    %s25 = sphi 0, %s27
    %s28 = sphi 0, %s25
    %s29 = sphi 0, %s28
    %s45 = sphi 0, %s29
    %s49 = sphi 0, %s49
    %s51 = sphi 0, %s49
    %s52 = sphi 0, %s51
    %s66 = sphi 0, %s52
    %s70 = sphi 0, %s70
    %s72 = sphi 0, %s70
    %s73 = sphi 0, %s72
    %s87 = sphi 0, %s73
    %s91 = sphi 0, %s91
    %s93 = sphi 0, %s91
    %s94 = sphi 0, %s93
    %s108 = sphi 0, %s94
    %s112 = sphi 0, %s112
    %s114 = sphi 0, %s112
    %s115 = sphi 0, %s114
    %s129 = sphi 0, %s115
    %s133 = sphi 0, %s133
    %s135 = sphi 0, %s133
    %s136 = sphi 0, %s135
    %s150 = sphi 0, %s136
    %s154 = sphi 0, %s154
    %s156 = sphi 0, %s154
    %s157 = sphi 0, %s156
    %s171 = sphi 0, %s157
    %s177 = sphi 0, %s179
    %s180 = sphi 0, %s177
    %s181 = sphi 0, %s180
    %s197 = sphi 0, %s181
  $region4: #{fcn_forward.1} parent=0 // loop_header_branch
    %18 = sbr.rel (%p16) target = $region8
  $region5: #{fcn_forward.1} parent=0 // loop_body
    %s20 = ssub.s32 %s15, 1
    %s21 = ssub.s32 %s15, 2
    %s22 = sadd.s32 %s15, 1
    %s23 = ssub.s32 %s15, %s22
    %p24 = scmp.eq.s32.totalorder %s23, 0
    %s26 = sadd.s32 %s25, 1
    %s27 = scalar_select %p24, %s25, %s26
    %p30 = pneg %p24
    %p31 = scmp.eq.s32.totalorder %s15, 2
    %p32 = por %p30, %p31
    %p33 = scmp.ne.s32.totalorder %s25, %s28
    %p34 = scmp.eq.s32.totalorder %s15, 0
    %p35 = por %p33, %p34
    %p36 = scmp.ne.s32.totalorder %s25, %s28
    %p37 = scmp.eq.s32.totalorder %s20, 2
    %p38 = por %p36, %p37
    %p39 = scmp.ne.s32.totalorder %s28, %s29
    %p40 = scmp.eq.s32.totalorder %s20, 0
    %p41 = por %p39, %p40
    %p42 = scmp.ne.s32.totalorder %s28, %s29
    %p43 = scmp.eq.s32.totalorder %s21, 2
    %p44 = por %p42, %p43
    %p46 = scmp.ne.s32.totalorder %s29, %s45
    %p47 = scmp.eq.s32.totalorder %s21, 0
    %p48 = por %p46, %p47
    %s50 = sadd.s32 %s49, 1
    %p53 = scmp.eq.s32.totalorder %s15, 2
    %p54 = scmp.ne.s32.totalorder %s49, %s51
    %p55 = scmp.eq.s32.totalorder %s15, 0
    %p56 = por %p54, %p55
    %p57 = scmp.ne.s32.totalorder %s49, %s51
    %p58 = scmp.eq.s32.totalorder %s20, 2
    %p59 = por %p57, %p58
    %p60 = scmp.ne.s32.totalorder %s51, %s52
    %p61 = scmp.eq.s32.totalorder %s20, 0
    %p62 = por %p60, %p61
    %p63 = scmp.ne.s32.totalorder %s51, %s52
    %p64 = scmp.eq.s32.totalorder %s21, 2
    %p65 = por %p63, %p64
    %p67 = scmp.ne.s32.totalorder %s52, %s66
    %p68 = scmp.eq.s32.totalorder %s21, 0
    %p69 = por %p67, %p68
    %s71 = sadd.s32 %s70, 1
    %p74 = scmp.eq.s32.totalorder %s15, 2
    %p75 = scmp.ne.s32.totalorder %s70, %s72
    %p76 = scmp.eq.s32.totalorder %s15, 0
    %p77 = por %p75, %p76
    %p78 = scmp.ne.s32.totalorder %s70, %s72
    %p79 = scmp.eq.s32.totalorder %s20, 2
    %p80 = por %p78, %p79
    %p81 = scmp.ne.s32.totalorder %s72, %s73
    %p82 = scmp.eq.s32.totalorder %s20, 0
    %p83 = por %p81, %p82
    %p84 = scmp.ne.s32.totalorder %s72, %s73
    %p85 = scmp.eq.s32.totalorder %s21, 2
    %p86 = por %p84, %p85
    %p88 = scmp.ne.s32.totalorder %s73, %s87
    %p89 = scmp.eq.s32.totalorder %s21, 0
    %p90 = por %p88, %p89
    %s92 = sadd.s32 %s91, 1
    %p95 = scmp.eq.s32.totalorder %s15, 2
    %p96 = scmp.ne.s32.totalorder %s91, %s93
    %p97 = scmp.eq.s32.totalorder %s15, 0
    %p98 = por %p96, %p97
    %p99 = scmp.ne.s32.totalorder %s91, %s93
    %p100 = scmp.eq.s32.totalorder %s20, 2
    %p101 = por %p99, %p100
    %p102 = scmp.ne.s32.totalorder %s93, %s94
    %p103 = scmp.eq.s32.totalorder %s20, 0
    %p104 = por %p102, %p103
    %p105 = scmp.ne.s32.totalorder %s93, %s94
    %p106 = scmp.eq.s32.totalorder %s21, 2
    %p107 = por %p105, %p106
    %p109 = scmp.ne.s32.totalorder %s94, %s108
    %p110 = scmp.eq.s32.totalorder %s21, 0
    %p111 = por %p109, %p110
    %s113 = sadd.s32 %s112, 1
    %p116 = scmp.eq.s32.totalorder %s15, 2
    %p117 = scmp.ne.s32.totalorder %s112, %s114
    %p118 = scmp.eq.s32.totalorder %s15, 0
    %p119 = por %p117, %p118
    %p120 = scmp.ne.s32.totalorder %s112, %s114
    %p121 = scmp.eq.s32.totalorder %s20, 2
    %p122 = por %p120, %p121
    %p123 = scmp.ne.s32.totalorder %s114, %s115
    %p124 = scmp.eq.s32.totalorder %s20, 0
    %p125 = por %p123, %p124
    %p126 = scmp.ne.s32.totalorder %s114, %s115
    %p127 = scmp.eq.s32.totalorder %s21, 2
    %p128 = por %p126, %p127
    %p130 = scmp.ne.s32.totalorder %s115, %s129
    %p131 = scmp.eq.s32.totalorder %s21, 0
    %p132 = por %p130, %p131
    %s134 = sadd.s32 %s133, 1
    %p137 = scmp.eq.s32.totalorder %s15, 2
    %p138 = scmp.ne.s32.totalorder %s133, %s135
    %p139 = scmp.eq.s32.totalorder %s15, 0
    %p140 = por %p138, %p139
    %p141 = scmp.ne.s32.totalorder %s133, %s135
    %p142 = scmp.eq.s32.totalorder %s20, 2
    %p143 = por %p141, %p142
    %p144 = scmp.ne.s32.totalorder %s135, %s136
    %p145 = scmp.eq.s32.totalorder %s20, 0
    %p146 = por %p144, %p145
    %p147 = scmp.ne.s32.totalorder %s135, %s136
    %p148 = scmp.eq.s32.totalorder %s21, 2
    %p149 = por %p147, %p148
    %p151 = scmp.ne.s32.totalorder %s136, %s150
    %p152 = scmp.eq.s32.totalorder %s21, 0
    %p153 = por %p151, %p152
    %s155 = sadd.s32 %s154, 1
    %p158 = scmp.eq.s32.totalorder %s15, 2
    %p159 = scmp.ne.s32.totalorder %s154, %s156
    %p160 = scmp.eq.s32.totalorder %s15, 0
    %p161 = por %p159, %p160
    %p162 = scmp.ne.s32.totalorder %s154, %s156
    %p163 = scmp.eq.s32.totalorder %s20, 2
    %p164 = por %p162, %p163
    %p165 = scmp.ne.s32.totalorder %s156, %s157
    %p166 = scmp.eq.s32.totalorder %s20, 0
    %p167 = por %p165, %p166
    %p168 = scmp.ne.s32.totalorder %s156, %s157
    %p169 = scmp.eq.s32.totalorder %s21, 2
    %p170 = por %p168, %p169
    %p172 = scmp.ne.s32.totalorder %s157, %s171
    %p173 = scmp.eq.s32.totalorder %s21, 0
    %p174 = por %p172, %p173
    %s175 = ssub.s32 %s15, %s22
    %p176 = scmp.eq.s32.totalorder %s175, 0
    %s178 = sadd.s32 %s177, 1
    %s179 = scalar_select %p176, %s177, %s178
    %p182 = pneg %p176
    %p183 = scmp.eq.s32.totalorder %s15, 2
    %p184 = por %p182, %p183
    %p185 = scmp.ne.s32.totalorder %s177, %s180
    %p186 = scmp.eq.s32.totalorder %s15, 0
    %p187 = por %p185, %p186
    %p188 = scmp.ne.s32.totalorder %s177, %s180
    %p189 = scmp.eq.s32.totalorder %s20, 2
    %p190 = por %p188, %p189
    %p191 = scmp.ne.s32.totalorder %s180, %s181
    %p192 = scmp.eq.s32.totalorder %s20, 0
    %p193 = por %p191, %p192
    %p194 = scmp.ne.s32.totalorder %s180, %s181
    %p195 = scmp.eq.s32.totalorder %s21, 2
    %p196 = por %p194, %p195
    %p198 = scmp.ne.s32.totalorder %s181, %s197
    %p199 = scmp.eq.s32.totalorder %s21, 0
    %p200 = por %p198, %p199
    %p201 = scmp.le.s32.totalorder 1, %s15
    %p202 = scmp.lt.s32.totalorder %s15, 4
    %p203 = pnand %p201, %p202
    %p204 = pneg %p203
    // Predicated region
    $region9: #{fcn_forward.1} parent=5 // pred_check
      _
    $region10: #{fcn_forward.1} parent=5 // pred_check_branch
      %206 = sbr.rel (%p203) target = $region12
    $region11: #{fcn_forward.1} parent=5 // pred_region
      %s207 = ssub.s32 %s15, 1
      // Predicated region
      $region13: #{fcn_forward.1} parent=11 // pred_check
        %p208 = pneg %p62
      $region14: #{fcn_forward.1} parent=11 // pred_check_branch
        %210 = sbr.rel (%p208) target = $region16
      $region15: #{fcn_forward.1} parent=11 // pred_region
        _
      $region16: #{fcn_forward.1} parent=11 // pred_fallthru
        _
      // Predicated region
      $region17: #{fcn_forward.1} parent=11 // pred_check
        %p211 = pneg %p83
      $region18: #{fcn_forward.1} parent=11 // pred_check_branch
        %213 = sbr.rel (%p211) target = $region20
      $region19: #{fcn_forward.1} parent=11 // pred_region
        _
      $region20: #{fcn_forward.1} parent=11 // pred_fallthru
        _
      // Predicated region
      $region21: #{fcn_forward.1} parent=11 // pred_check
        %p214 = pneg %p104
      $region22: #{fcn_forward.1} parent=11 // pred_check_branch
        %216 = sbr.rel (%p214) target = $region24
      $region23: #{fcn_forward.1} parent=11 // pred_region
        _
      $region24: #{fcn_forward.1} parent=11 // pred_fallthru
        _
      // Predicated region
      $region25: #{fcn_forward.1} parent=11 // pred_check
        %p217 = pneg %p125
      $region26: #{fcn_forward.1} parent=11 // pred_check_branch
        %219 = sbr.rel (%p217) target = $region28
      $region27: #{fcn_forward.1} parent=11 // pred_region
        _
      $region28: #{fcn_forward.1} parent=11 // pred_fallthru
        _
      // Predicated region
      $region29: #{fcn_forward.1} parent=11 // pred_check
        %p220 = pneg %p146
      $region30: #{fcn_forward.1} parent=11 // pred_check_branch
        %222 = sbr.rel (%p220) target = $region32
      $region31: #{fcn_forward.1} parent=11 // pred_region
        _
      $region32: #{fcn_forward.1} parent=11 // pred_fallthru
        _
      // Predicated region
      $region33: #{fcn_forward.1} parent=11 // pred_check
        %p223 = pneg %p167
      $region34: #{fcn_forward.1} parent=11 // pred_check_branch
        %225 = sbr.rel (%p223) target = $region36
      $region35: #{fcn_forward.1} parent=11 // pred_region
        _
      $region36: #{fcn_forward.1} parent=11 // pred_fallthru
        _
    $region12: #{fcn_forward.1} parent=5 // pred_fallthru
      _
    %p226 = scmp.lt.s32.totalorder %s15, 3
    // Predicated region
    $region37: #{fcn_forward.1} parent=5 // pred_check
      %p227 = pneg %p226
    $region38: #{fcn_forward.1} parent=5 // pred_check_branch
      %229 = sbr.rel (%p227) target = $region40
    $region39: #{fcn_forward.1} parent=5 // pred_region
      // Predicated region
      $region41: #{fcn_forward.1} parent=39 // pred_check
        %p230 = pneg %p35
      $region42: #{fcn_forward.1} parent=39 // pred_check_branch
        %232 = sbr.rel (%p230) target = $region44
      $region43: #{fcn_forward.1} parent=39 // pred_region
        %p233 = scmp.lt.s32.totalorder %s15, 2
        %s234 = scalar_select %p233, %s15, 2
        %s235 = smul.addr %s234, 2
        %s236 = scalar_lea.vmem %s0, %s235
      $region44: #{fcn_forward.1} parent=39 // pred_fallthru
        _
    $region40: #{fcn_forward.1} parent=5 // pred_fallthru
      _
    %p237 = scmp.le.s32.totalorder 1, %s15
    %p238 = scmp.lt.s32.totalorder %s15, 4
    %p239 = pnand %p237, %p238
    %p240 = pneg %p239
    // Predicated region
    $region45: #{fcn_forward.1} parent=5 // pred_check
      _
    $region46: #{fcn_forward.1} parent=5 // pred_check_branch
      %242 = sbr.rel (%p239) target = $region48
    $region47: #{fcn_forward.1} parent=5 // pred_region
      %s243 = ssub.s32 %s15, 1
      %p244 = scmp.lt.s32.totalorder %s20, 2
      %s245 = scalar_select %p244, %s20, 2
      %s246 = smul.addr %s245, 2
      %s247 = scalar_lea.vmem %s0, %s246
      %p248 = pneg %p41
      %p249 = pneg %p38
      %p250 = pneg %p62
      %p251 = pneg %p59
      %p252 = pneg %p83
      %p253 = pneg %p80
      %p254 = pneg %p104
      %p255 = pneg %p101
      %p256 = pneg %p125
      %p257 = pneg %p122
      %p258 = pneg %p146
      %p259 = pneg %p143
      %p260 = pneg %p167
      %p261 = pneg %p164
      %p262 = pneg %p193
      %p263 = pneg %p190
      %p264 = scmp.lt.s32.totalorder %s20, 2
      %s265 = scalar_select %p264, %s20, 2
      %s266 = scalar_lea.vmem %s7, %s265
      %p267 = scmp.lt.s32.totalorder %s20, 2
      %s268 = scalar_select %p267, %s20, 2
      %s269 = smul.addr %s268, 2
      %s270 = scalar_lea.vmem %s0, %s269
      %p271 = scmp.lt.s32.totalorder %s20, 2
      %s272 = scalar_select %p271, %s20, 2
      %s273 = scalar_lea.vmem %s7, %s272
      %v274 = vld [vmem:[%s1] sm:$0xff]
      %v275 = vld [vmem:[%s1 + $0x8] sm:$0xff]
      %v276 = vld [vmem:[%s1 + $0x10] sm:$0xff]
      %v277 = vld [vmem:[%s1 + $0x18] sm:$0xff]
      %v278 = vld [vmem:[%s2] sm:$0xff]
      %v279 = vld [vmem:[%s2 + $0x8] sm:$0xff]
      %v280 = vld [vmem:[%s2 + $0x10] sm:$0xff]
      %v281 = vld [vmem:[%s2 + $0x18] sm:$0xff]
      %v282 = vld [vmem:[%s5] sm:$0x1]
      %v283 = vld [vmem:[#allocation2] sm:$0x1]
      %v284 = vld [vmem:[%s3] sm:$0xff]
      %v285 = vld [vmem:[%s3 + $0x8] sm:$0xff]
      %v286 = vld [vmem:[%s3 + $0x10] sm:$0xff]
      %v287 = vld [vmem:[%s3 + $0x18] sm:$0xff]
      %s288 = scalar_lea.vmem %s3, 32
      %v289 = vld [vmem:[%s288] sm:$0xff]
      %v290 = vld [vmem:[%s288 + $0x8] sm:$0xff]
      %v291 = vld [vmem:[%s288 + $0x10] sm:$0xff]
      %v292 = vld [vmem:[%s288 + $0x18] sm:$0xff]
      %v293 = vld [vmem:[%s4] sm:$0xff]
      %v294 = vld [vmem:[%s4 + $0x8] sm:$0xff]
      %v295 = vld [vmem:[%s4 + $0x10] sm:$0xff]
      %v296 = vld [vmem:[%s4 + $0x18] sm:$0xff]
      %s297 = scalar_lea.vmem %s4, 32
      %v298 = vld [vmem:[%s297] sm:$0xff]
      %v299 = vld [vmem:[%s297 + $0x8] sm:$0xff]
      %v300 = vld [vmem:[%s297 + $0x10] sm:$0xff]
      %v301 = vld [vmem:[%s297 + $0x18] sm:$0xff]
      %v302 = vld [vmem:[%s270] sm:$0x3]
      %304 = vset.pattern.permute.xlu0 0
      %305 = vperm.xlu0 %304, %v274
      %v306 = vpop.permute.xlu0 %305
      %309 = vset.pattern.permute.xlu0 0
      %310 = vperm.xlu0 %309, %v275
      %v311 = vpop.permute.xlu0 %310
      %314 = vset.pattern.permute.xlu0 0
      %315 = vperm.xlu0 %314, %v276
      %v316 = vpop.permute.xlu0 %315
      %319 = vset.pattern.permute.xlu0 0
      %320 = vperm.xlu0 %319, %v277
      %v321 = vpop.permute.xlu0 %320
      %v323 = vlaneseq
      %v324 = vshrl.u32 %v323, 7
      %v325 = vsub.s32 0, %v324
      %v326 = vrot.slane %v302, %v325
      %v327 = vmul.f32 %v306, %v326
      %v328 = vmul.f32 %v311, %v326
      %v329 = vmul.f32 %v316, %v326
      %v330 = vmul.f32 %v321, %v326
      %331 = vset.pattern.permute.xlu0 1
      %332 = vperm.xlu0 %331, %v274
      %v333 = vpop.permute.xlu0 %332
      %335 = vset.pattern.permute.xlu0 1
      %336 = vperm.xlu0 %335, %v275
      %v337 = vpop.permute.xlu0 %336
      %339 = vset.pattern.permute.xlu0 1
      %340 = vperm.xlu0 %339, %v276
      %v341 = vpop.permute.xlu0 %340
      %343 = vset.pattern.permute.xlu0 1
      %344 = vperm.xlu0 %343, %v277
      %v345 = vpop.permute.xlu0 %344
      %v347 = vlaneseq
      %v348 = vshrl.u32 %v347, 7
      %v349 = vsub.s32 1, %v348
      %v350 = vrot.slane %v302, %v349
      %v351 = vmul.f32 %v333, %v350
      %v352 = vmul.f32 %v337, %v350
      %v353 = vmul.f32 %v341, %v350
      %v354 = vmul.f32 %v345, %v350
      %v355 = vadd.f32 %v327, %v351
      %v356 = vadd.f32 %v328, %v352
      %v357 = vadd.f32 %v329, %v353
      %v358 = vadd.f32 %v330, %v354
      %360 = vset.pattern.permute.xlu0 0
      %361 = vperm.xlu0 %360, %v278
      %v362 = vpop.permute.xlu0 %361
      %365 = vset.pattern.permute.xlu0 0
      %366 = vperm.xlu0 %365, %v279
      %v367 = vpop.permute.xlu0 %366
      %370 = vset.pattern.permute.xlu0 0
      %371 = vperm.xlu0 %370, %v280
      %v372 = vpop.permute.xlu0 %371
      %375 = vset.pattern.permute.xlu0 0
      %376 = vperm.xlu0 %375, %v281
      %v377 = vpop.permute.xlu0 %376
      %v379 = vadd.f32 %v355, %v362
      %v380 = vadd.f32 %v356, %v367
      %v381 = vadd.f32 %v357, %v372
      %v382 = vadd.f32 %v358, %v377
      %v383 = vtanh.pop %v379
      %v384 = vtanh.pop %v380
      %v385 = vtanh.pop %v381
      %v386 = vtanh.pop %v382
      %388 = vset.pattern.permute.xlu0 0
      %389 = vperm.xlu0 %388, %v293
      %v390 = vpop.permute.xlu0 %389
      %393 = vset.pattern.permute.xlu0 0
      %394 = vperm.xlu0 %393, %v294
      %v395 = vpop.permute.xlu0 %394
      %398 = vset.pattern.permute.xlu0 0
      %399 = vperm.xlu0 %398, %v295
      %v400 = vpop.permute.xlu0 %399
      %403 = vset.pattern.permute.xlu0 0
      %404 = vperm.xlu0 %403, %v296
      %v405 = vpop.permute.xlu0 %404
      %vm407 = vcmask 261120
      %v409 = vsel %vm407, %v284, 0
      %v412 = vsel %vm407, %v285, 0
      %v415 = vsel %vm407, %v286, 0
      %v418 = vsel %vm407, %v287, 0
      %420 = vmatprep.subr.mxu0 0.0
      %421 = vmatpush1.msra.mxu0 %v383
      %422 = vmatprep.subr.mxu0 0.0
      %423 = vmatpush1.msra.mxu0 %v384
      %424 = vmatprep.subr.mxu0 0.0
      %425 = vmatpush1.msra.mxu0 %v385
      %426 = vmatprep.subr.mxu0 0.0
      %427 = vmatpush1.msra.mxu0 %v386
      %428 = vmatprep.subr.mxu0 0.0
      %429 = vmatpush1.msra.mxu0 0.0
      %430 = vmatprep.subr.mxu0 0.0
      %431 = vmatpush1.msra.mxu0 0.0
      %432 = vmatprep.subr.mxu0 0.0
      %433 = vmatpush1.msra.mxu0 0.0
      %434 = vmatprep.subr.mxu0 0.0
      %435 = vmatpush1.msra.mxu0 0.0
      %436 = vmatprep.subr.mxu0 0.0
      %437 = vmatpush1.msra.mxu0 0.0
      %438 = vmatprep.subr.mxu0 0.0
      %439 = vmatpush1.msra.mxu0 0.0
      %440 = vmatprep.subr.mxu0 0.0
      %441 = vmatpush1.msra.mxu0 0.0
      %442 = vmatprep.subr.mxu0 0.0
      %443 = vmatpush1.msra.mxu0 0.0
      %444 = vmatprep.subr.mxu0 0.0
      %445 = vmatpush1.msra.mxu0 0.0
      %446 = vmatprep.subr.mxu0 0.0
      %447 = vmatpush1.msra.mxu0 0.0
      %448 = vmatprep.subr.mxu0 0.0
      %449 = vmatpush1.msra.mxu0 0.0
      %450 = vmatprep.subr.mxu0 0.0
      %451 = vmatpush1.msra.mxu0 0.0
      %452 = vmatprep.subr.mxu0 0.0
      %453 = vmatpush1.msra.mxu0 0.0
      %454 = vmatprep.subr.mxu0 0.0
      %455 = vmatpush1.msra.mxu0 0.0
      %456 = vmatprep.subr.mxu0 0.0
      %457 = vmatpush1.msra.mxu0 0.0
      %458 = vmatprep.subr.mxu0 0.0
      %459 = vmatpush1.msra.mxu0 0.0
      %460 = vmatprep.subr.mxu0 0.0
      %461 = vmatpush1.msra.mxu0 0.0
      %462 = vmatprep.subr.mxu0 0.0
      %463 = vmatpush1.msra.mxu0 0.0
      %464 = vmatprep.subr.mxu0 0.0
      %465 = vmatpush1.msra.mxu0 0.0
      %466 = vmatprep.subr.mxu0 0.0
      %467 = vmatpush1.msra.mxu0 0.0
      %468 = vmatprep.subr.mxu0 0.0
      %469 = vmatpush1.msra.mxu0 0.0
      %470 = vmatprep.subr.mxu0 0.0
      %471 = vmatpush1.msra.mxu0 0.0
      %472 = vmatprep.subr.mxu0 0.0
      %473 = vmatpush1.msra.mxu0 0.0
      %474 = vmatprep.subr.mxu0 0.0
      %475 = vmatpush1.msra.mxu0 0.0
      %476 = vmatprep.subr.mxu0 0.0
      %477 = vmatpush1.msra.mxu0 0.0
      %478 = vmatprep.subr.mxu0 0.0
      %479 = vmatpush1.msra.mxu0 0.0
      %480 = vmatprep.subr.mxu0 0.0
      %481 = vmatpush1.msra.mxu0 0.0
      %482 = vmatprep.subr.mxu0 0.0
      %483 = vmatpush1.msra.mxu0 0.0
      %484 = vmatprep.mubr.f32.mxu0 0.0
      %485 = vmatmul.mubr.f32.gmra.mrb[0].mxu0 %v409
      %v486 = vpop.f32.mrb[0].mxu0
      %v487 = vadd.f32 %v390, %v486
      %v488 = vpop.f32.mrb[0].mxu0
      %489 = vmatprep.mubr.f32.mxu0 0.0
      %490 = vmatmul.mubr.f32.gmra.mrb[0].mxu0 %v412
      %v491 = vpop.f32.mrb[0].mxu0
      %v492 = vadd.f32 %v395, %v491
      %v493 = vpop.f32.mrb[0].mxu0
      %494 = vmatprep.mubr.f32.mxu0 0.0
      %495 = vmatmul.mubr.f32.gmra.mrb[0].mxu0 %v415
      %v496 = vpop.f32.mrb[0].mxu0
      %v497 = vadd.f32 %v400, %v496
      %v498 = vpop.f32.mrb[0].mxu0
      %499 = vmatprep.mubr.f32.mxu0 0.0
      %500 = vmatmul.mubr.f32.gmra.mrb[0].mxu0 %v418
      %v501 = vpop.f32.mrb[0].mxu0
      %v502 = vadd.f32 %v405, %v501
      %v503 = vpop.f32.mrb[0].mxu0
      %504 = vdwg.mxu0
      %v505 = vtanh.pop %v487
      %v506 = vtanh.pop %v492
      %v507 = vtanh.pop %v497
      %v508 = vtanh.pop %v502
      %510 = vset.pattern.permute.xlu0 0
      %511 = vperm.xlu0 %510, %v298
      %v512 = vpop.permute.xlu0 %511
      %515 = vset.pattern.permute.xlu0 0
      %516 = vperm.xlu0 %515, %v299
      %v517 = vpop.permute.xlu0 %516
      %520 = vset.pattern.permute.xlu0 0
      %521 = vperm.xlu0 %520, %v300
      %v522 = vpop.permute.xlu0 %521
      %525 = vset.pattern.permute.xlu0 0
      %526 = vperm.xlu0 %525, %v301
      %v527 = vpop.permute.xlu0 %526
      %v530 = vsel %vm407, %v289, 0
      %v533 = vsel %vm407, %v290, 0
      %v536 = vsel %vm407, %v291, 0
      %v539 = vsel %vm407, %v292, 0
      %541 = vmatprep.subr.mxu0 0.0
      %542 = vmatpush1.msra.mxu0 %v505
      %543 = vmatprep.subr.mxu0 0.0
      %544 = vmatpush1.msra.mxu0 %v506
      %545 = vmatprep.subr.mxu0 0.0
      %546 = vmatpush1.msra.mxu0 %v507
      %547 = vmatprep.subr.mxu0 0.0
      %548 = vmatpush1.msra.mxu0 %v508
      %549 = vmatprep.subr.mxu0 0.0
      %550 = vmatpush1.msra.mxu0 0.0
      %551 = vmatprep.subr.mxu0 0.0
      %552 = vmatpush1.msra.mxu0 0.0
      %553 = vmatprep.subr.mxu0 0.0
      %554 = vmatpush1.msra.mxu0 0.0
      %555 = vmatprep.subr.mxu0 0.0
      %556 = vmatpush1.msra.mxu0 0.0
      %557 = vmatprep.subr.mxu0 0.0
      %558 = vmatpush1.msra.mxu0 0.0
      %559 = vmatprep.subr.mxu0 0.0
      %560 = vmatpush1.msra.mxu0 0.0
      %561 = vmatprep.subr.mxu0 0.0
      %562 = vmatpush1.msra.mxu0 0.0
      %563 = vmatprep.subr.mxu0 0.0
      %564 = vmatpush1.msra.mxu0 0.0
      %565 = vmatprep.subr.mxu0 0.0
      %566 = vmatpush1.msra.mxu0 0.0
      %567 = vmatprep.subr.mxu0 0.0
      %568 = vmatpush1.msra.mxu0 0.0
      %569 = vmatprep.subr.mxu0 0.0
      %570 = vmatpush1.msra.mxu0 0.0
      %571 = vmatprep.subr.mxu0 0.0
      %572 = vmatpush1.msra.mxu0 0.0
      %573 = vmatprep.subr.mxu0 0.0
      %574 = vmatpush1.msra.mxu0 0.0
      %575 = vmatprep.subr.mxu0 0.0
      %576 = vmatpush1.msra.mxu0 0.0
      %577 = vmatprep.subr.mxu0 0.0
      %578 = vmatpush1.msra.mxu0 0.0
      %579 = vmatprep.subr.mxu0 0.0
      %580 = vmatpush1.msra.mxu0 0.0
      %581 = vmatprep.subr.mxu0 0.0
      %582 = vmatpush1.msra.mxu0 0.0
      %583 = vmatprep.subr.mxu0 0.0
      %584 = vmatpush1.msra.mxu0 0.0
      %585 = vmatprep.subr.mxu0 0.0
      %586 = vmatpush1.msra.mxu0 0.0
      %587 = vmatprep.subr.mxu0 0.0
      %588 = vmatpush1.msra.mxu0 0.0
      %589 = vmatprep.subr.mxu0 0.0
      %590 = vmatpush1.msra.mxu0 0.0
      %591 = vmatprep.subr.mxu0 0.0
      %592 = vmatpush1.msra.mxu0 0.0
      %593 = vmatprep.subr.mxu0 0.0
      %594 = vmatpush1.msra.mxu0 0.0
      %595 = vmatprep.subr.mxu0 0.0
      %596 = vmatpush1.msra.mxu0 0.0
      %597 = vmatprep.subr.mxu0 0.0
      %598 = vmatpush1.msra.mxu0 0.0
      %599 = vmatprep.subr.mxu0 0.0
      %600 = vmatpush1.msra.mxu0 0.0
      %601 = vmatprep.subr.mxu0 0.0
      %602 = vmatpush1.msra.mxu0 0.0
      %603 = vmatprep.subr.mxu0 0.0
      %604 = vmatpush1.msra.mxu0 0.0
      %605 = vmatprep.mubr.f32.mxu0 0.0
      %606 = vmatmul.mubr.f32.gmra.mrb[0].mxu0 %v530
      %v607 = vpop.f32.mrb[0].mxu0
      %v608 = vadd.f32 %v512, %v607
      %v609 = vpop.f32.mrb[0].mxu0
      %610 = vmatprep.mubr.f32.mxu0 0.0
      %611 = vmatmul.mubr.f32.gmra.mrb[0].mxu0 %v533
      %v612 = vpop.f32.mrb[0].mxu0
      %v613 = vadd.f32 %v517, %v612
      %v614 = vpop.f32.mrb[0].mxu0
      %615 = vmatprep.mubr.f32.mxu0 0.0
      %616 = vmatmul.mubr.f32.gmra.mrb[0].mxu0 %v536
      %v617 = vpop.f32.mrb[0].mxu0
      %v618 = vadd.f32 %v522, %v617
      %v619 = vpop.f32.mrb[0].mxu0
      %620 = vmatprep.mubr.f32.mxu0 0.0
      %621 = vmatmul.mubr.f32.gmra.mrb[0].mxu0 %v539
      %v622 = vpop.f32.mrb[0].mxu0
      %v623 = vadd.f32 %v527, %v622
      %v624 = vpop.f32.mrb[0].mxu0
      %625 = vdwg.mxu0
      %v626 = vtanh.pop %v608
      %v627 = vtanh.pop %v613
      %v628 = vtanh.pop %v618
      %v629 = vtanh.pop %v623
      %631 = vset.pattern.permute.xlu0 0
      %632 = vperm.xlu0 %631, %v283
      %v633 = vpop.permute.xlu0 %632
      %v635 = vlaneseq
      %v636 = vshrl.u32 %v635, 7
      %v637 = vsub.s32 0, %v636
      %v638 = vrot.slane %v633, %v637
      %v640 = vsel %vm407, %v282, 0
      %642 = vmatprep.subr.mxu0 0.0
      %643 = vmatpush1.msra.mxu0 %v626
      %644 = vmatprep.subr.mxu0 0.0
      %645 = vmatpush1.msra.mxu0 %v627
      %646 = vmatprep.subr.mxu0 0.0
      %647 = vmatpush1.msra.mxu0 %v628
      %648 = vmatprep.subr.mxu0 0.0
      %649 = vmatpush1.msra.mxu0 %v629
      %650 = vmatprep.subr.mxu0 0.0
      %651 = vmatpush1.msra.mxu0 0.0
      %652 = vmatprep.subr.mxu0 0.0
      %653 = vmatpush1.msra.mxu0 0.0
      %654 = vmatprep.subr.mxu0 0.0
      %655 = vmatpush1.msra.mxu0 0.0
      %656 = vmatprep.subr.mxu0 0.0
      %657 = vmatpush1.msra.mxu0 0.0
      %658 = vmatprep.subr.mxu0 0.0
      %659 = vmatpush1.msra.mxu0 0.0
      %660 = vmatprep.subr.mxu0 0.0
      %661 = vmatpush1.msra.mxu0 0.0
      %662 = vmatprep.subr.mxu0 0.0
      %663 = vmatpush1.msra.mxu0 0.0
      %664 = vmatprep.subr.mxu0 0.0
      %665 = vmatpush1.msra.mxu0 0.0
      %666 = vmatprep.subr.mxu0 0.0
      %667 = vmatpush1.msra.mxu0 0.0
      %668 = vmatprep.subr.mxu0 0.0
      %669 = vmatpush1.msra.mxu0 0.0
      %670 = vmatprep.subr.mxu0 0.0
      %671 = vmatpush1.msra.mxu0 0.0
      %672 = vmatprep.subr.mxu0 0.0
      %673 = vmatpush1.msra.mxu0 0.0
      %674 = vmatprep.subr.mxu0 0.0
      %675 = vmatpush1.msra.mxu0 0.0
      %676 = vmatprep.subr.mxu0 0.0
      %677 = vmatpush1.msra.mxu0 0.0
      %678 = vmatprep.subr.mxu0 0.0
      %679 = vmatpush1.msra.mxu0 0.0
      %680 = vmatprep.subr.mxu0 0.0
      %681 = vmatpush1.msra.mxu0 0.0
      %682 = vmatprep.subr.mxu0 0.0
      %683 = vmatpush1.msra.mxu0 0.0
      %684 = vmatprep.subr.mxu0 0.0
      %685 = vmatpush1.msra.mxu0 0.0
      %686 = vmatprep.subr.mxu0 0.0
      %687 = vmatpush1.msra.mxu0 0.0
      %688 = vmatprep.subr.mxu0 0.0
      %689 = vmatpush1.msra.mxu0 0.0
      %690 = vmatprep.subr.mxu0 0.0
      %691 = vmatpush1.msra.mxu0 0.0
      %692 = vmatprep.subr.mxu0 0.0
      %693 = vmatpush1.msra.mxu0 0.0
      %694 = vmatprep.subr.mxu0 0.0
      %695 = vmatpush1.msra.mxu0 0.0
      %696 = vmatprep.subr.mxu0 0.0
      %697 = vmatpush1.msra.mxu0 0.0
      %698 = vmatprep.subr.mxu0 0.0
      %699 = vmatpush1.msra.mxu0 0.0
      %700 = vmatprep.subr.mxu0 0.0
      %701 = vmatpush1.msra.mxu0 0.0
      %702 = vmatprep.subr.mxu0 0.0
      %703 = vmatpush1.msra.mxu0 0.0
      %704 = vmatprep.subr.mxu0 0.0
      %705 = vmatpush1.msra.mxu0 0.0
      %706 = vmatprep.mubr.f32.mxu0 0.0
      %707 = vmatmul.mubr.f32.gmra.mrb[0].mxu0 %v640
      %v708 = vpop.f32.mrb[0].mxu0
      %v709 = vadd.f32 %v638, %v708
      %v710 = vpop.f32.mrb[0].mxu0
      %711 = vdwg.mxu0
      %712 = vst [vmem:[%s273] sm:$0x1] %v709
      %p713 = scmp.lt.s32.totalorder %s20, 2
      %s714 = scalar_select %p713, %s20, 2
      %s715 = scalar_lea.vmem %s7, %s714
      // Predicated region
      $region49: #{fcn_forward.1} parent=47 // pred_check
        %p716 = pneg %p190
      $region50: #{fcn_forward.1} parent=47 // pred_check_branch
        %718 = sbr.rel (%p716) target = $region52
      $region51: #{fcn_forward.1} parent=47 // pred_region
        _
      $region52: #{fcn_forward.1} parent=47 // pred_fallthru
        _
    $region48: #{fcn_forward.1} parent=5 // pred_fallthru
      _
    %p719 = scmp.le.s32.totalorder 2, %s15
    // Predicated region
    $region53: #{fcn_forward.1} parent=5 // pred_check
      %p720 = pneg %p719
    $region54: #{fcn_forward.1} parent=5 // pred_check_branch
      %722 = sbr.rel (%p720) target = $region56
    $region55: #{fcn_forward.1} parent=5 // pred_region
      %s723 = ssub.s32 %s15, 2
      // Predicated region
      $region57: #{fcn_forward.1} parent=55 // pred_check
        %p724 = pneg %p196
      $region58: #{fcn_forward.1} parent=55 // pred_check_branch
        %726 = sbr.rel (%p724) target = $region60
      $region59: #{fcn_forward.1} parent=55 // pred_region
        %p727 = scmp.lt.s32.totalorder %s21, 2
        %s728 = scalar_select %p727, %s21, 2
        %s729 = scalar_lea.vmem %s7, %s728
      $region60: #{fcn_forward.1} parent=55 // pred_fallthru
        _
    $region56: #{fcn_forward.1} parent=5 // pred_fallthru
      _
  $region6: #{fcn_forward.1} parent=0 // loop_footer
    %s19 = sadd.s32 1, %s15
  $region7: #{fcn_forward.1} parent=0 // loop_footer_branch
    %14 = sbr.rel target = $region3
  $region8: #{fcn_forward.1} parent=0 // loop_exit
    _

</llo_original>
